<compile_context>
chip_gen: v7x
topology: tpu7x:2x2x1
jax: 0.10.0
libtpu: 0.0.40
codegen_flags: <defaults>
</compile_context>

<pallas_src>
import functools

import jax
import jax.numpy as jnp
from jax.experimental import pallas as pl
from jax.experimental.pallas import tpu as pltpu


# ----------------------------------------------------------------------------
# Small helpers
# ----------------------------------------------------------------------------

def _round_up(x: int, m: int) -> int:
    return (x + m - 1) // m * m


def _vmem_capacity_bytes() -> int:
    """Physical VMEM per core; conservative (v7x-sized) fallback."""
    try:
        info = pltpu.get_tpu_info()
        cap = getattr(info, "vmem_capacity_bytes", None)
        if cap:
            return int(cap)
    except Exception:
        pass
    return 64 * 1024 * 1024


def _pick_tile(dim_pad: int, base: int, unit: int = 128) -> int:
    """Largest multiple of `unit` that divides dim_pad and is <= base."""
    base = max(unit, min(int(base), dim_pad))
    best, t = unit, unit
    while t <= base:
        if dim_pad % t == 0:
            best = t
        t += unit
    return best


def _pad_2d(a, rows, cols, dtype):
    """Pad/cast a 2-D array; pass through untouched if already aligned."""
    if a.shape == (rows, cols) and a.dtype == jnp.dtype(dtype):
        return a
    return jnp.zeros((rows, cols), dtype).at[:a.shape[0], :a.shape[1]].set(
        a.astype(dtype))


def _param_row(v, cols):
    """(out_dim,) -> (1, cols) f32 row, padding only when needed."""
    v = v.astype(jnp.float32).reshape(1, -1)
    if v.shape[1] == cols:
        return v
    return jnp.zeros((1, cols), jnp.float32).at[:, :v.shape[1]].set(v)


def _w_block_spec(shape, index_map, nbuf):
    """W BlockSpec with optional deeper pipelining (graceful fallback)."""
    if nbuf > 2:
        try:
            return pl.BlockSpec(shape, index_map, pipeline_mode=pl.Buffered(nbuf))
        except (TypeError, AttributeError):
            pass
    return pl.BlockSpec(shape, index_map)


# ----------------------------------------------------------------------------
# Fused kernel (whole batch resident): matmul accumulate + BN/bias + ReLU
# ----------------------------------------------------------------------------

def _make_fused_kernel(*, use_bn, eps, n_true, n_rows, tk, x_resident):
    def x_block(x_ref, k):
        if x_resident:
            off = pl.multiple_of(k * tk, 128)
            return x_ref[:, pl.ds(off, tk)]
        return x_ref[...]

    def accumulate(x_ref, w_ref, o_ref):
        k = pl.program_id(1)

        @pl.when(k == 0)
        def _():
            o_ref[...] = jnp.zeros_like(o_ref)

        # MXU partial product; accumulate directly into the resident f32 out.
        o_ref[...] += jnp.dot(x_block(x_ref, k), w_ref[...],
                              preferred_element_type=jnp.float32)
        return k

    if use_bn:
        def kernel(x_ref, w_ref, gamma_ref, beta_ref, o_ref):
            k = accumulate(x_ref, w_ref, o_ref)

            @pl.when(k == pl.num_programs(1) - 1)
            def _():
                y = o_ref[...]                      # f32 (n_rows, tn)
                inv_n = 1.0 / float(n_true)
                # Padded rows are exactly zero (zero inputs, no bias), so the
                # mean sum is already exact when divided by the true batch.
                mean = jnp.sum(y, axis=0, keepdims=True) * inv_n
                if n_true == n_rows:
                    yc = y - mean
                else:
                    rows = jax.lax.broadcasted_iota(jnp.int32, y.shape, 0)
                    yc = jnp.where(rows < n_true, y - mean, 0.0)
                # Two-pass centered variance (no catastrophic cancellation).
                var = jnp.sum(yc * yc, axis=0, keepdims=True) * inv_n
                scale = jax.lax.rsqrt(var + eps) * gamma_ref[...]
                # ReLU; dropout is identity (eval semantics).
                o_ref[...] = jnp.maximum(yc * scale + beta_ref[...], 0.0)
    else:
        def kernel(x_ref, w_ref, b_ref, o_ref):
            k = accumulate(x_ref, w_ref, o_ref)

            @pl.when(k == pl.num_programs(1) - 1)
            def _():
                o_ref[...] = jnp.maximum(o_ref[...] + b_ref[...], 0.0)

    return kernel


# ----------------------------------------------------------------------------
# Batch-tiled path (large N with BN): matmul + partial column sums, then a
# lightweight scale/shift/ReLU normalization kernel.
# ----------------------------------------------------------------------------

def _matmul_stats_kernel(x_ref, w_ref, y_ref, s_ref, s2_ref):
    bi = pl.program_id(1)
    k = pl.program_id(2)

    @pl.when(k == 0)
    def _():
        y_ref[...] = jnp.zeros_like(y_ref)

    @pl.when(jnp.logical_and(bi == 0, k == 0))
    def _():
        s_ref[...] = jnp.zeros_like(s_ref)
        s2_ref[...] = jnp.zeros_like(s2_ref)

    y_ref[...] += jnp.dot(x_ref[...], w_ref[...],
                          preferred_element_type=jnp.float32)

    @pl.when(k == pl.num_programs(2) - 1)
    def _():
        yv = y_ref[...]
        # Padded batch rows are exactly zero -> contribute zero to both sums.
        s_ref[...] += jnp.sum(yv, axis=0, keepdims=True)
        s2_ref[...] += jnp.sum(yv * yv, axis=0, keepdims=True)


def _scale_shift_relu_kernel(y_ref, scale_ref, shift_ref, o_ref):
    o_ref[...] = jnp.maximum(y_ref[...] * scale_ref[...] + shift_ref[...], 0.0)


# ----------------------------------------------------------------------------
# Wrapper
# ----------------------------------------------------------------------------

def dense_layer_forward(x, w, b, gamma, beta, *, eps=1e-5,
                        matmul_dtype=jnp.bfloat16,
                        tile_n=None, tile_k=None, tile_b=None,
                        force_path=None):
    """x: (N, in_dim); w: (in_dim, out_dim); b/gamma/beta: (out_dim,)."""
    n, in_dim = x.shape
    in_dim_w, out_dim = w.shape
    assert in_dim_w == in_dim

    use_bn = n > 1  # mirrors `if len(x) > 1` (static-shape decision)

    msz = jnp.dtype(matmul_dtype).itemsize
    n_pad = _round_up(max(n, 1), 16)        # bf16 sublane packing
    in_pad = _round_up(in_dim, 128)         # lane-dense
    out_pad = _round_up(out_dim, 128)

    # Generation-gated VMEM budget / tile defaults.
    cap = _vmem_capacity_bytes()
    big_vmem = cap >= 100 * 2**20           # v5e / v6e (128 MiB)
    limit_cap = (100 * 2**20) if big_vmem else (48 * 2**20)   # v7x: 64 MiB phys
    base_tile = 1024 if big_vmem else 512
    two_core = not big_vmem                 # v7x-like: 2 TensorCores per chip

    tn = _pick_tile(out_pad, tile_n or base_tile)
    tk = _pick_tile(in_pad, tile_k or base_tile)
    # Keep both v7x TensorCores busy on the 'parallel' output axis.
    if two_core and out_pad >= 256 and out_pad // tn < 2 and tn > 256:
        tn = _pick_tile(out_pad, max(256, out_pad // 2))

    slack = 256 * 1024   # small param rows + compiler-internal headroom

    def ws_fused(tn_, tk_, nbuf_w, resident):
        x_bytes = 2 * n_pad * (in_pad if resident else tk_) * msz
        return (x_bytes + nbuf_w * tk_ * tn_ * msz
                + 2 * n_pad * tn_ * 4 + slack)

    def ws_tiled(tb_, tn_, tk_, nbuf_w):
        return (2 * tb_ * tk_ * msz + nbuf_w * tk_ * tn_ * msz
                + 2 * tb_ * tn_ * 4 + 8 * tn_ * 4 + slack)

    def fit(ws_fn, tn0, tk0):
        bn, bk = tn0, tk0
        tn_, tk_ = _pick_tile(out_pad, bn), _pick_tile(in_pad, bk)
        while ws_fn(tn_, tk_, 2) > limit_cap and (bk > 128 or bn > 256):
            if bk > 128:
                bk //= 2
            else:
                bn //= 2
            tn_, tk_ = _pick_tile(out_pad, bn), _pick_tile(in_pad, bk)
        return tn_, tk_, ws_fn(tn_, tk_, 2) <= limit_cap

    # Path selection: fused (resident x) -> fused (x streamed by K) -> tiled.
    tn_f, tk_f, fits_res = fit(lambda a, b_, c: ws_fused(a, b_, c, True), tn, tk)
    x_resident = fits_res
    if fits_res:
        fits_str = True
    else:
        tn_f, tk_f, fits_str = fit(lambda a, b_, c: ws_fused(a, b_, c, False),
                                   tn, tk)
    use_tiled = use_bn and not (fits_res or fits_str)
    if force_path == "tiled" and use_bn:
        use_tiled = True
    elif force_path == "fused":
        use_tiled = False

    # ------------------------------------------------------------------ fused
    if not use_tiled:
        tn_, tk_ = tn_f, tk_f
        n_j, n_k = out_pad // tn_, in_pad // tk_
        w_tiles = n_j * n_k
        nbuf_w = 3 if (w_tiles >= 3
                       and ws_fused(tn_, tk_, 3, x_resident) <= limit_cap) else 2
        ws = ws_fused(tn_, tk_, nbuf_w, x_resident)
        vmem_limit = int(min(limit_cap, max(ws + ws // 4 + (2 << 20), 16 << 20)))

        # Pass-through (no pad/cast copy) when already aligned + right dtype.
        xp = _pad_2d(x, n_pad, in_pad, matmul_dtype)
        wp = _pad_2d(w, in_pad, out_pad, matmul_dtype)

        kernel = _make_fused_kernel(use_bn=use_bn, eps=eps, n_true=n,
                                    n_rows=n_pad, tk=tk_, x_resident=x_resident)

        if x_resident:
            x_spec = pl.BlockSpec((n_pad, in_pad), lambda j, k: (0, 0))
            x_reads = 1
        else:
            x_spec = pl.BlockSpec((n_pad, tk_), lambda j, k: (0, k))
            x_reads = n_j

        in_specs = [x_spec, _w_block_spec((tk_, tn_), lambda j, k: (k, j), nbuf_w)]
        args = [xp, wp]
        if use_bn:   # bias is dead under BN -> don't even DMA it
            in_specs += [pl.BlockSpec((1, tn_), lambda j, k: (0, j)),
                         pl.BlockSpec((1, tn_), lambda j, k: (0, j))]
            args += [_param_row(gamma, out_pad), _param_row(beta, out_pad)]
        else:
            in_specs += [pl.BlockSpec((1, tn_), lambda j, k: (0, j))]
            args += [_param_row(b, out_pad)]

        cost = pl.CostEstimate(
            flops=2 * n * in_dim * out_dim,
            transcendentals=out_pad,
            bytes_accessed=(x_reads * n_pad * in_pad * msz
                            + in_pad * out_pad * msz
                            + n_pad * out_pad * 4))

        out_padded = pl.pallas_call(
            kernel,
            out_shape=jax.ShapeDtypeStruct((n_pad, out_pad), jnp.float32),
            grid_spec=pltpu.PrefetchScalarGridSpec(
                num_scalar_prefetch=0,
                grid=(n_j, n_k),
                in_specs=in_specs,
                out_specs=pl.BlockSpec((n_pad, tn_), lambda j, k: (0, j)),
            ),
            compiler_params=pltpu.CompilerParams(
                dimension_semantics=("parallel", "arbitrary"),
                vmem_limit_bytes=vmem_limit),
            cost_estimate=cost,
        )(*args)
        return out_padded[:n, :out_dim]

    # ------------------------------------------------------------------ tiled
    tb = tile_b or (1024 if big_vmem else 512)
    tb = max(16, _round_up(min(tb, _round_up(n, 16)), 16))
    n_pad_t = _round_up(n, tb)

    tn_t, tk_t, _ = fit(lambda a, b_, c: ws_tiled(tb, a, b_, c), tn, tk)
    n_j, n_b, n_k = out_pad // tn_t, n_pad_t // tb, in_pad // tk_t
    w_tiles = n_j * n_k
    nbuf_w = 3 if (w_tiles >= 3
                   and ws_tiled(tb, tn_t, tk_t, 3) <= limit_cap) else 2
    ws = ws_tiled(tb, tn_t, tk_t, nbuf_w)
    vmem_limit = int(min(limit_cap, max(ws + ws // 4 + (2 << 20), 16 << 20)))

    xp = _pad_2d(x, n_pad_t, in_pad, matmul_dtype)
    wp = _pad_2d(w, in_pad, out_pad, matmul_dtype)

    cost_a = pl.CostEstimate(
        flops=2 * n * in_dim * out_dim,
        transcendentals=0,
        bytes_accessed=(n_j * n_pad_t * in_pad * msz    # x re-read per out tile
                        + in_pad * out_pad * msz
                        + n_pad_t * out_pad * 4 + 2 * out_pad * 4))

    y, s, s2 = pl.pallas_call(
        _matmul_stats_kernel,
        out_shape=(jax.ShapeDtypeStruct((n_pad_t, out_pad), jnp.float32),
                   jax.ShapeDtypeStruct((1, out_pad), jnp.float32),
                   jax.ShapeDtypeStruct((1, out_pad), jnp.float32)),
        grid_spec=pltpu.PrefetchScalarGridSpec(
            num_scalar_prefetch=0,
            grid=(n_j, n_b, n_k),
            in_specs=[pl.BlockSpec((tb, tk_t), lambda j, bi, k: (bi, k)),
                      _w_block_spec((tk_t, tn_t), lambda j, bi, k: (k, j),
                                    nbuf_w)],
            out_specs=(pl.BlockSpec((tb, tn_t), lambda j, bi, k: (bi, j)),
                       pl.BlockSpec((1, tn_t), lambda j, bi, k: (0, j)),
                       pl.BlockSpec((1, tn_t), lambda j, bi, k: (0, j))),
        ),
        compiler_params=pltpu.CompilerParams(
            dimension_semantics=("parallel", "arbitrary", "arbitrary"),
            vmem_limit_bytes=vmem_limit),
        cost_estimate=cost_a,
    )(xp, wp)

    # Tiny (1, out_pad) reduction -> per-column scale/shift (plain XLA glue).
    inv_n = 1.0 / float(n)
    mean = s * inv_n
    var = jnp.maximum(s2 * inv_n - mean * mean, 0.0)   # one-pass across tiles
    scale = _param_row(gamma, out_pad) * jax.lax.rsqrt(var + eps)
    shift = _param_row(beta, out_pad) - mean * scale

    cost_b = pl.CostEstimate(
        flops=3 * n_pad_t * out_pad, transcendentals=0,
        bytes_accessed=2 * n_pad_t * out_pad * 4)

    out_padded = pl.pallas_call(
        _scale_shift_relu_kernel,
        out_shape=jax.ShapeDtypeStruct((n_pad_t, out_pad), jnp.float32),
        grid_spec=pltpu.PrefetchScalarGridSpec(
            num_scalar_prefetch=0,
            grid=(n_b, n_j),
            in_specs=[pl.BlockSpec((tb, tn_t), lambda bi, j: (bi, j)),
                      pl.BlockSpec((1, tn_t), lambda bi, j: (0, j)),
                      pl.BlockSpec((1, tn_t), lambda bi, j: (0, j))],
            out_specs=pl.BlockSpec((tb, tn_t), lambda bi, j: (bi, j)),
        ),
        compiler_params=pltpu.CompilerParams(
            dimension_semantics=("parallel", "parallel"),
            vmem_limit_bytes=vmem_limit),
        cost_estimate=cost_b,
    )(y, scale, shift)

    return out_padded[:n, :out_dim]


# ----------------------------------------------------------------------------
# Reference & test
# ----------------------------------------------------------------------------

def _reference(x, w, b, gamma, beta, eps=1e-5):
    y = jnp.dot(x, w, precision=jax.lax.Precision.HIGHEST) + b
    if x.shape[0] > 1:
        mean = y.mean(axis=0, keepdims=True)
        var = ((y - mean) ** 2).mean(axis=0, keepdims=True)
        y = (y - mean) / jnp.sqrt(var + eps) * gamma + beta
    return jnp.maximum(y, 0.0)


if __name__ == "__main__":
    key = jax.random.PRNGKey(0)
    N, IN_DIM, OUT_DIM = 8, 32, 64

    kx, kw, kb, kx2 = jax.random.split(key, 4)
    x = jax.random.normal(kx, (N, IN_DIM), dtype=jnp.float32)

    # Deterministic params matching nn.Linear's uniform(-1/sqrt(in), 1/sqrt(in)).
    bound = 1.0 / jnp.sqrt(jnp.float32(IN_DIM))
    w = jax.random.uniform(kw, (IN_DIM, OUT_DIM), jnp.float32, -bound, bound)
    b = jax.random.uniform(kb, (OUT_DIM,), jnp.float32, -bound, bound)
    gamma = jnp.ones((OUT_DIM,), jnp.float32)   # BatchNorm1d default weight
    beta = jnp.zeros((OUT_DIM,), jnp.float32)   # BatchNorm1d default bias

    ref = _reference(x, w, b, gamma, beta)

    # Fused path: default bf16-MXU and f32-MXU (tight structural check).
    out_bf16 = jax.block_until_ready(dense_layer_forward(x, w, b, gamma, beta))
    out_f32 = jax.block_until_ready(
        dense_layer_forward(x, w, b, gamma, beta, matmul_dtype=jnp.float32))
    assert out_bf16.shape == (N, OUT_DIM)
    assert jnp.allclose(out_f32, ref, atol=1e-3, rtol=1e-3), "fused f32 mismatch"
    assert jnp.allclose(out_bf16, ref, atol=2e-2, rtol=2e-2), "fused bf16 mismatch"

    # batch == 1 path: no BatchNorm (mirrors `if len(x) > 1`), bias + ReLU only.
    x1 = x[:1]
    out1 = jax.block_until_ready(
        dense_layer_forward(x1, w, b, gamma, beta, matmul_dtype=jnp.float32))
    assert jnp.allclose(out1, _reference(x1, w, b, gamma, beta),
                        atol=1e-3, rtol=1e-3), "n=1 mismatch"

    # Batch-tiled (large-N) path, forced at small shape so it is exercised:
    # 3 batch tiles of 16 rows, last tile has padded rows.
    N2 = 40
    x2 = jax.random.normal(kx2, (N2, IN_DIM), dtype=jnp.float32)
    out_t = jax.block_until_ready(
        dense_layer_forward(x2, w, b, gamma, beta, matmul_dtype=jnp.float32,
                            force_path="tiled", tile_b=16))
    assert jnp.allclose(out_t, _reference(x2, w, b, gamma, beta),
                        atol=1e-3, rtol=1e-3), "tiled mismatch"

    print("KERNEL_OK")
</pallas_src>

<mosaic_0001>
module attributes {stable_mosaic.version = 11 : i64} {
  func.func @kernel(%arg0: i32, %arg1: i32, %arg2: memref<16x128xbf16, #tpu.memory_space<vmem>>, %arg3: memref<128x128xbf16, #tpu.memory_space<vmem>>, %arg4: memref<1x128xf32, #tpu.memory_space<vmem>>, %arg5: memref<1x128xf32, #tpu.memory_space<vmem>>, %arg6: memref<16x128xf32, #tpu.memory_space<vmem>>) attributes {dimension_semantics = [#tpu.dimension_semantics<parallel>, #tpu.dimension_semantics<arbitrary>], iteration_bounds = array<i64: 1, 1>, scalar_prefetch = 0 : i64, scratch_operands = 0 : i64, tpu.core_type = #tpu.core_type<tc>, window_params = [{pipeline_mode = #tpu.pipeline_mode<synchronous>, transform_indices = @transform_0, window_bounds = array<i64: 16, 128>}, {transform_indices = @transform_1, window_bounds = array<i64: 128, 128>}, {transform_indices = @transform_2, window_bounds = array<i64: 1, 128>}, {transform_indices = @transform_3, window_bounds = array<i64: 1, 128>}, {transform_indices = @transform_4, window_bounds = array<i64: 16, 128>}]} {
    %c0_i32 = arith.constant 0 : i32
    %0 = arith.cmpi eq, %arg1, %c0_i32 : i32
    %1 = arith.extui %0 : i1 to i32
    %c0_i32_0 = arith.constant 0 : i32
    %2 = arith.cmpi ne, %1, %c0_i32_0 : i32
    scf.if %2 {
      %cst_9 = arith.constant 0.000000e+00 : f32
      %15 = vector.broadcast %cst_9 : f32 to vector<16x128xf32>
      %c0_10 = arith.constant 0 : index
      %c0_11 = arith.constant 0 : index
      %16 = vector.load %arg6[%c0_10, %c0_11] : memref<16x128xf32, #tpu.memory_space<vmem>>, vector<16x128xf32>
      tpu.vector_store %arg6[%c0_10, %c0_11], %15 {strides = array<i32>} : memref<16x128xf32, #tpu.memory_space<vmem>>, vector<16x128xf32>,
    } else {
    }
    %c0 = arith.constant 0 : index
    %c0_1 = arith.constant 0 : index
    %3 = vector.load %arg6[%c0, %c0_1] : memref<16x128xf32, #tpu.memory_space<vmem>>, vector<16x128xf32>
    %c128_i32 = arith.constant 128 : i32
    %4 = arith.muli %arg1, %c128_i32 : i32
    %5 = tpu.assume_multiple %4, 128 : i32
    %c0_2 = arith.constant 0 : index
    %6 = arith.index_cast %5 : i32 to index
    %7 = vector.load %arg2[%c0_2, %6] : memref<16x128xbf16, #tpu.memory_space<vmem>>, vector<16x128xbf16>
    %c0_3 = arith.constant 0 : index
    %c0_4 = arith.constant 0 : index
    %8 = vector.load %arg3[%c0_3, %c0_4] : memref<128x128xbf16, #tpu.memory_space<vmem>>, vector<128x128xbf16>
    %cst = arith.constant dense<0.000000e+00> : vector<16x128xf32>
    %9 = tpu.matmul %7, %8, %cst {dimension_numbers = #tpu.dot_dimension_numbers<[1], [0], [0], [1], [0, 0, 1, 1], [], []>} : vector<16x128xbf16>, vector<128x128xbf16>, vector<16x128xf32> -> vector<16x128xf32>
    %10 = arith.addf %3, %9 : vector<16x128xf32>
    %c0_5 = arith.constant 0 : index
    %c0_6 = arith.constant 0 : index
    %11 = vector.load %arg6[%c0_5, %c0_6] : memref<16x128xf32, #tpu.memory_space<vmem>>, vector<16x128xf32>
    tpu.vector_store %arg6[%c0_5, %c0_6], %10 {strides = array<i32>} : memref<16x128xf32, #tpu.memory_space<vmem>>, vector<16x128xf32>,
    %c0_i32_7 = arith.constant 0 : i32
    %12 = arith.cmpi eq, %arg1, %c0_i32_7 : i32
    %13 = arith.extui %12 : i1 to i32
    %c0_i32_8 = arith.constant 0 : i32
    %14 = arith.cmpi ne, %13, %c0_i32_8 : i32
    scf.if %14 {
      %c0_9 = arith.constant 0 : index
      %c0_10 = arith.constant 0 : index
      %15 = vector.load %arg6[%c0_9, %c0_10] : memref<16x128xf32, #tpu.memory_space<vmem>>, vector<16x128xf32>
      %cst_11 = arith.constant dense<0.000000e+00> : vector<128xf32>
      %16 = vector.multi_reduction <add>, %15, %cst_11 [0] : vector<16x128xf32> to vector<128xf32>
      %17 = vector.shape_cast %16 : vector<128xf32> to vector<1x128xf32>
      %cst_12 = arith.constant 1.250000e-01 : f32
      %18 = vector.broadcast %cst_12 : f32 to vector<1x128xf32>
      %19 = arith.mulf %17, %18 : vector<1x128xf32>
      %20 = tpu.iota {dimensions = array<i32: 0>} : vector<16x128xi32>
      %c8_i32 = arith.constant 8 : i32
      %21 = vector.broadcast %c8_i32 : i32 to vector<16x128xi32>
      %22 = arith.cmpi slt, %20, %21 : vector<16x128xi32>
      %23 = vector.broadcast %19 : vector<1x128xf32> to vector<16x128xf32>
      %24 = arith.subf %15, %23 : vector<16x128xf32>
      %cst_13 = arith.constant 0.000000e+00 : f32
      %25 = vector.broadcast %cst_13 : f32 to vector<16x128xf32>
      %26 = arith.select %22, %24, %25 : vector<16x128xi1>, vector<16x128xf32>
      %27 = arith.mulf %26, %26 : vector<16x128xf32>
      %cst_14 = arith.constant dense<0.000000e+00> : vector<128xf32>
      %28 = vector.multi_reduction <add>, %27, %cst_14 [0] : vector<16x128xf32> to vector<128xf32>
      %29 = vector.shape_cast %28 : vector<128xf32> to vector<1x128xf32>
      %cst_15 = arith.constant 1.250000e-01 : f32
      %30 = vector.broadcast %cst_15 : f32 to vector<1x128xf32>
      %31 = arith.mulf %29, %30 : vector<1x128xf32>
      %cst_16 = arith.constant 9.99999974E-6 : f32
      %32 = vector.broadcast %cst_16 : f32 to vector<1x128xf32>
      %33 = arith.addf %31, %32 : vector<1x128xf32>
      %34 = math.rsqrt %33 : vector<1x128xf32>
      %c0_17 = arith.constant 0 : index
      %c0_18 = arith.constant 0 : index
      %35 = vector.load %arg4[%c0_17, %c0_18] : memref<1x128xf32, #tpu.memory_space<vmem>>, vector<1x128xf32>
      %36 = arith.mulf %34, %35 : vector<1x128xf32>
      %37 = vector.broadcast %36 : vector<1x128xf32> to vector<16x128xf32>
      %38 = arith.mulf %26, %37 : vector<16x128xf32>
      %c0_19 = arith.constant 0 : index
      %c0_20 = arith.constant 0 : index
      %39 = vector.load %arg5[%c0_19, %c0_20] : memref<1x128xf32, #tpu.memory_space<vmem>>, vector<1x128xf32>
      %40 = vector.broadcast %39 : vector<1x128xf32> to vector<16x128xf32>
      %41 = arith.addf %38, %40 : vector<16x128xf32>
      %cst_21 = arith.constant 0.000000e+00 : f32
      %42 = vector.broadcast %cst_21 : f32 to vector<16x128xf32>
      %43 = arith.maximumf %41, %42 : vector<16x128xf32>
      %c0_22 = arith.constant 0 : index
      %c0_23 = arith.constant 0 : index
      %44 = vector.load %arg6[%c0_22, %c0_23] : memref<16x128xf32, #tpu.memory_space<vmem>>, vector<16x128xf32>
      tpu.vector_store %arg6[%c0_22, %c0_23], %43 {strides = array<i32>} : memref<16x128xf32, #tpu.memory_space<vmem>>, vector<16x128xf32>,
    } else {
    }
    return
  }
  func.func @transform_0(%arg0: i32, %arg1: i32) -> (i32, i32) {
    %c0_i32 = arith.constant 0 : i32
    %c0_i32_0 = arith.constant 0 : i32
    %c0_i32_1 = arith.constant 0 : i32
    return %c0_i32, %c0_i32_0 : i32, i32
  }
  func.func @transform_1(%arg0: i32, %arg1: i32) -> (i32, i32) {
    %c0_i32 = arith.constant 0 : i32
    return %arg1, %arg0 : i32, i32
  }
  func.func @transform_2(%arg0: i32, %arg1: i32) -> (i32, i32) {
    %c0_i32 = arith.constant 0 : i32
    %c0_i32_0 = arith.constant 0 : i32
    return %c0_i32, %arg0 : i32, i32
  }
  func.func @transform_3(%arg0: i32, %arg1: i32) -> (i32, i32) {
    %c0_i32 = arith.constant 0 : i32
    %c0_i32_0 = arith.constant 0 : i32
    return %c0_i32, %arg0 : i32, i32
  }
  func.func @transform_4(%arg0: i32, %arg1: i32) -> (i32, i32) {
    %c0_i32 = arith.constant 0 : i32
    %c0_i32_0 = arith.constant 0 : i32
    return %c0_i32, %arg0 : i32, i32
  }
}

</mosaic_0001>

<llo_original>
// kernel: tpu_custom_call.1
$region0: #{tpu_custom_call.1}
  #allocation0 [shape = 'u32[]', space=smem, size = 0x4, offset = 0x4, fixed_abs, tag = 'smem constant byte address 0x4 - core index']
  #allocation1 [shape = 'u32[144,128]{1,0:T(1,128)}', space=vmem, size = 0x12000, scoped, tag = 'internal scratch']
  %s0 = inlined_call_operand.hbm [shape: bf16[16,128], index: 0, kind: input, shape index: {}]
  %s1 = inlined_call_operand.hbm [shape: bf16[128,128], index: 1, kind: input, shape index: {}]
  %s2 = inlined_call_operand.vmem [shape: f32[1,128], index: 2, kind: input, shape index: {}]
  %s3 = inlined_call_operand.vmem [shape: f32[1,128], index: 3, kind: input, shape index: {}]
  %s4 = inlined_call_operand.hbm [shape: f32[16,128], index: 4, kind: output, shape index: {}]
  %s5 = sld [smem:[#allocation0]]
  $region42: #{tpu_custom_call.1} parent=0
    _
  %s7 = ssub.s32 1, %s5
  %s8 = scalar_select 0, %s7, %s5
  $region1: #{tpu_custom_call.1} parent=0
    #allocation2 [shape = 'u8[4096]{0}', space=vmem, size = 0x1000, scoped, tag = 'input window, operand 0, single buffered']
    #allocation3 [shape = 's32[1]{0}', space=sflag, size = 0x4, scoped, tag = 'scoped memory for tpu_custom_call.1']
    #allocation4 [shape = 's32[1]{0}', space=sflag, size = 0x4, scoped, tag = 'scoped memory for tpu_custom_call.1']
    #allocation5 [shape = 'u8[32768]{0}', space=vmem, size = 0x8000, scoped, tag = 'input window, operand 1, single buffered']
    #allocation6 [shape = 's32[1]{0}', space=sflag, size = 0x4, scoped, tag = 'scoped memory for tpu_custom_call.1']
    #allocation7 [shape = 'u8[8192]{0}', space=vmem, size = 0x2000, scoped, tag = 'output window, operand 0, single buffered']
    %9 = vsyncpa [#allocation3], 0
    %10 = vsyncpa [#allocation6], 0
    %11 = vsyncpa [#allocation4], 0
    // Predicated region
    $region2: #{tpu_custom_call.1} parent=1 // pred_check
      _
    $region3: #{tpu_custom_call.1} parent=1 // pred_check_branch
      %13 = sbr.rel (0) target = $region5
    $region4: #{tpu_custom_call.1} parent=1 // pred_region
      %s15 = ssub.s32 128, 128
      %16 = vsyncadd [#allocation3], %s15
      %s17 = sshll.u32 [#allocation2], 4
      %s18 = int_to_ptr.vmem [resolvable:$true] %s17
      %23 = dma.hbm_to_vmem [thread:$0]  %s0, 128, %s18, [#allocation3], 64, 64, 4
    $region5: #{tpu_custom_call.1} parent=1 // pred_fallthru
      _
    // Predicated region
    $region6: #{tpu_custom_call.1} parent=1 // pred_check
      _
    $region7: #{tpu_custom_call.1} parent=1 // pred_check_branch
      %25 = sbr.rel (0) target = $region9
    $region8: #{tpu_custom_call.1} parent=1 // pred_region
      %s27 = ssub.s32 1024, 1024
      %28 = vsyncadd [#allocation6], %s27
      %s29 = sshll.u32 [#allocation5], 4
      %s30 = int_to_ptr.vmem [resolvable:$true] %s29
      %35 = dma.hbm_to_vmem [thread:$0]  %s1, 1024, %s30, [#allocation6], 64, 64, 4
    $region9: #{tpu_custom_call.1} parent=1 // pred_fallthru
      _
    // Predicated region
    $region10: #{tpu_custom_call.1} parent=1 // pred_check
      _
    $region11: #{tpu_custom_call.1} parent=1 // pred_check_branch
      %37 = sbr.rel (0) target = $region13
    $region12: #{tpu_custom_call.1} parent=1 // pred_region
      _
    $region13: #{tpu_custom_call.1} parent=1 // pred_fallthru
      _
    // Predicated region
    $region14: #{tpu_custom_call.1} parent=1 // pred_check
      _
    $region15: #{tpu_custom_call.1} parent=1 // pred_check_branch
      %39 = sbr.rel (0) target = $region17
    $region16: #{tpu_custom_call.1} parent=1 // pred_region
      _
    $region17: #{tpu_custom_call.1} parent=1 // pred_fallthru
      _
    // Predicated region
    $region18: #{tpu_custom_call.1} parent=1 // pred_check
      _
    $region19: #{tpu_custom_call.1} parent=1 // pred_check_branch
      %41 = sbr.rel (0) target = $region21
    $region20: #{tpu_custom_call.1} parent=1 // pred_region
      %42 = dma.done [#allocation3], 128
    $region21: #{tpu_custom_call.1} parent=1 // pred_fallthru
      _
    // Predicated region
    $region22: #{tpu_custom_call.1} parent=1 // pred_check
      _
    $region23: #{tpu_custom_call.1} parent=1 // pred_check_branch
      %44 = sbr.rel (0) target = $region25
    $region24: #{tpu_custom_call.1} parent=1 // pred_region
      %45 = dma.done [#allocation6], 1024
    $region25: #{tpu_custom_call.1} parent=1 // pred_fallthru
      _
    %p47 = scmp.eq.s32.totalorder 0, 0
    // Predicated region
    $region26: #{tpu_custom_call.1} parent=1 // pred_check
      %p48 = pneg %p47
    $region27: #{tpu_custom_call.1} parent=1 // pred_check_branch
      %50 = sbr.rel (%p48) target = $region29
    $region28: #{tpu_custom_call.1} parent=1 // pred_region
      %51 = vst [vmem:[#allocation7] sm:$0xff] 0.0
      %52 = vst [vmem:[#allocation7 + $0x8] sm:$0xff] 0.0
    $region29: #{tpu_custom_call.1} parent=1 // pred_fallthru
      _
    %v53 = vld [vmem:[#allocation7] sm:$0xff]
    %v54 = vld [vmem:[#allocation7 + $0x8] sm:$0xff]
    %s55 = smul.u32 0, 128
    %s56 = sshra.s32 %s55, 7
    %s57 = sand.u32 %s55, 127
    %s58 = smul.addr %s56, 4
    %s59 = scalar_lea.vmem [#allocation2], %s58
    %v60 = vld [vmem:[%s59] sm:$0xf]
    %v61 = vld [vmem:[%s59 + $0x4] sm:$0xf]
    %v62 = vld [vmem:[#allocation5] sm:$0xf]
    %v63 = vld [vmem:[#allocation5 + $0x4] sm:$0xf]
    %v64 = vld [vmem:[#allocation5 + $0x8] sm:$0xf]
    %v65 = vld [vmem:[#allocation5 + $0xc] sm:$0xf]
    %v66 = vld [vmem:[#allocation5 + $0x10] sm:$0xf]
    %v67 = vld [vmem:[#allocation5 + $0x14] sm:$0xf]
    %v68 = vld [vmem:[#allocation5 + $0x18] sm:$0xf]
    %v69 = vld [vmem:[#allocation5 + $0x1c] sm:$0xf]
    %v70 = vld [vmem:[#allocation5 + $0x20] sm:$0xf]
    %v71 = vld [vmem:[#allocation5 + $0x24] sm:$0xf]
    %v72 = vld [vmem:[#allocation5 + $0x28] sm:$0xf]
    %v73 = vld [vmem:[#allocation5 + $0x2c] sm:$0xf]
    %v74 = vld [vmem:[#allocation5 + $0x30] sm:$0xf]
    %v75 = vld [vmem:[#allocation5 + $0x34] sm:$0xf]
    %v76 = vld [vmem:[#allocation5 + $0x38] sm:$0xf]
    %v77 = vld [vmem:[#allocation5 + $0x3c] sm:$0xf]
    %v80 = vunpack.c.l.b16 %v60
    %v81 = vunpack.c.l.b16 %v61
    %v82 = vpack.c.b16 %v81, %v80
    %v100 = vunpack.c.l.b16 %v62
    %v101 = vunpack.c.l.b16 %v63
    %v102 = vunpack.c.l.b16 %v64
    %v103 = vunpack.c.l.b16 %v65
    %v104 = vunpack.c.l.b16 %v66
    %v105 = vunpack.c.l.b16 %v67
    %v106 = vunpack.c.l.b16 %v68
    %v107 = vunpack.c.l.b16 %v69
    %v108 = vunpack.c.l.b16 %v70
    %v109 = vunpack.c.l.b16 %v71
    %v110 = vunpack.c.l.b16 %v72
    %v111 = vunpack.c.l.b16 %v73
    %v112 = vunpack.c.l.b16 %v74
    %v113 = vunpack.c.l.b16 %v75
    %v114 = vunpack.c.l.b16 %v76
    %v115 = vunpack.c.l.b16 %v77
    %v116 = vpack.c.b16 %v101, %v100
    %v117 = vpack.c.b16 %v103, %v102
    %v118 = vpack.c.b16 %v105, %v104
    %v119 = vpack.c.b16 %v107, %v106
    %v120 = vpack.c.b16 %v109, %v108
    %v121 = vpack.c.b16 %v111, %v110
    %v122 = vpack.c.b16 %v113, %v112
    %v123 = vpack.c.b16 %v115, %v114
    %132 = vmatprep.subr.bf16.mxu0 0
    %133 = vmatpush1.bf16.msra.mxu0 %v116
    %134 = vmatprep.subr.bf16.mxu0 0
    %135 = vmatpush1.bf16.msra.mxu0 %v117
    %136 = vmatprep.subr.bf16.mxu0 0
    %137 = vmatpush1.bf16.msra.mxu0 %v118
    %138 = vmatprep.subr.bf16.mxu0 0
    %139 = vmatpush1.bf16.msra.mxu0 %v119
    %140 = vmatprep.subr.bf16.mxu0 0
    %141 = vmatpush1.bf16.msra.mxu0 %v120
    %142 = vmatprep.subr.bf16.mxu0 0
    %143 = vmatpush1.bf16.msra.mxu0 %v121
    %144 = vmatprep.subr.bf16.mxu0 0
    %145 = vmatpush1.bf16.msra.mxu0 %v122
    %146 = vmatprep.subr.bf16.mxu0 0
    %147 = vmatpush1.bf16.msra.mxu0 %v123
    %148 = vmatprep.subr.bf16.mxu0 0
    %149 = vmatpush1.bf16.msra.mxu0 0
    %150 = vmatprep.subr.bf16.mxu0 0
    %151 = vmatpush1.bf16.msra.mxu0 0
    %152 = vmatprep.subr.bf16.mxu0 0
    %153 = vmatpush1.bf16.msra.mxu0 0
    %154 = vmatprep.subr.bf16.mxu0 0
    %155 = vmatpush1.bf16.msra.mxu0 0
    %156 = vmatprep.subr.bf16.mxu0 0
    %157 = vmatpush1.bf16.msra.mxu0 0
    %158 = vmatprep.subr.bf16.mxu0 0
    %159 = vmatpush1.bf16.msra.mxu0 0
    %160 = vmatprep.subr.bf16.mxu0 0
    %161 = vmatpush1.bf16.msra.mxu0 0
    %162 = vmatprep.subr.bf16.mxu0 0
    %163 = vmatpush1.bf16.msra.mxu0 0
    %164 = vmatprep.mubr.bf16.mxu0 0
    %165 = vmatmul.mubr.bf16.gmra.mrb[0].mxu0 %v82
    %v166 = vpop.f32.mrb[0].mxu0
    %v167 = vadd.f32 0.0, %v166
    %v168 = vpop.f32.mrb[0].mxu0
    %v169 = vpop.f32.mrb[0].mxu0
    %v170 = vadd.f32 0.0, %v169
    %v171 = vpop.f32.mrb[0].mxu0
    %172 = vdwg.mxu0
    %v173 = vadd.f32 %v53, %v167
    %v174 = vadd.f32 %v54, %v170
    %175 = vst [vmem:[#allocation7] sm:$0xff] %v173
    %176 = vst [vmem:[#allocation7 + $0x8] sm:$0xff] %v174
    // Predicated region
    $region30: #{tpu_custom_call.1} parent=1 // pred_check
      %p177 = pneg %p47
    $region31: #{tpu_custom_call.1} parent=1 // pred_check_branch
      %179 = sbr.rel (%p177) target = $region33
    $region32: #{tpu_custom_call.1} parent=1 // pred_region
      %v180 = vld [vmem:[#allocation7] sm:$0xff]
      %v181 = vld [vmem:[#allocation7 + $0x8] sm:$0xff]
      %v182 = vadd.f32 %v180, %v181
      %v183 = vrot.slane %v182, 4
      %v184 = vadd.f32 %v182, %v183
      %v185 = vrot.slane %v184, 2
      %v186 = vadd.f32 %v184, %v185
      %v187 = vrot.slane %v186, 1
      %v188 = vadd.f32 %v186, %v187
      %v189 = vmul.f32 %v188, 0.125
      %v190 = vlaneseq
      %v191 = vshrl.u32 %v190, 7
      %v192 = vadd.s32 %v191, 8
      %vm193 = vcmp.lt.s32.totalorder %v191, 8
      %vm194 = vcmp.lt.s32.totalorder %v192, 8
      %v195 = vsub.f32 %v180, %v189
      %v196 = vsub.f32 %v181, %v189
      %v197 = vsel %vm193, %v195, 0.0
      %v198 = vsel %vm194, %v196, 0.0
      %v199 = vmul.f32 %v197, %v197
      %v200 = vmul.f32 %v198, %v198
      %v201 = vadd.f32 %v199, %v200
      %v202 = vrot.slane %v201, 4
      %v203 = vadd.f32 %v201, %v202
      %v204 = vrot.slane %v203, 2
      %v205 = vadd.f32 %v203, %v204
      %v206 = vrot.slane %v205, 1
      %v207 = vadd.f32 %v205, %v206
      %v208 = vmul.f32 %v207, 0.125
      %v209 = vadd.f32 %v208, 1e-05
      %v210 = vrsqrt.pop %v209
      %v211 = vld [vmem:[%s2] sm:$0x1]
      %v212 = vmul.f32 %v210, %v211
      %v213 = vlaneseq
      %v214 = vshrl.u32 %v213, 7
      %v215 = vsub.s32 0, %v214
      %v216 = vrot.slane %v212, %v215
      %v217 = vmul.f32 %v197, %v216
      %v218 = vmul.f32 %v198, %v216
      %v219 = vld [vmem:[%s3] sm:$0x1]
      %v221 = vlaneseq
      %v222 = vshrl.u32 %v221, 7
      %v223 = vsub.s32 0, %v222
      %v224 = vrot.slane %v219, %v223
      %v226 = vadd.f32 %v217, %v224
      %v227 = vadd.f32 %v218, %v224
      %v228 = vmax.f32 %v226, 0.0
      %v229 = vmax.f32 %v227, 0.0
      %230 = vst [vmem:[#allocation7] sm:$0xff] %v228
      %231 = vst [vmem:[#allocation7 + $0x8] sm:$0xff] %v229
    $region33: #{tpu_custom_call.1} parent=1 // pred_fallthru
      _
    // Predicated region
    $region34: #{tpu_custom_call.1} parent=1 // pred_check
      _
    $region35: #{tpu_custom_call.1} parent=1 // pred_check_branch
      %233 = sbr.rel (0) target = $region37
    $region36: #{tpu_custom_call.1} parent=1 // pred_region
      %s235 = ssub.s32 256, 256
      %236 = vsyncadd [#allocation4], %s235
      %s237 = sshll.u32 [#allocation7], 4
      %s238 = int_to_ptr.vmem [resolvable:$true] %s237
      %243 = dma.vmem_to_hbm [thread:$0]  %s238, 256, %s4, [#allocation4], 128, 128, 8
    $region37: #{tpu_custom_call.1} parent=1 // pred_fallthru
      _
    // Predicated region
    $region38: #{tpu_custom_call.1} parent=1 // pred_check
      _
    $region39: #{tpu_custom_call.1} parent=1 // pred_check_branch
      %245 = sbr.rel (0) target = $region41
    $region40: #{tpu_custom_call.1} parent=1 // pred_region
      %246 = dma.done [#allocation4], 256
    $region41: #{tpu_custom_call.1} parent=1 // pred_fallthru
      _
    %247 = vsyncpa [#allocation3], 1
    %248 = vsyncpa [#allocation6], 1
    %249 = vsyncpa [#allocation4], 1

</llo_original>
